<compile_context>
chip_gen: v6e
topology: v6e:2x2x1
jax: 0.10.0
libtpu: 0.0.40
codegen_flags: <defaults>
</compile_context>

<pallas_src>
import functools

import jax
import jax.numpy as jnp
from jax import lax
from jax.experimental import pallas as pl
from jax.experimental.pallas import tpu as pltpu


_EPS = 1e-12          # matches torch.nn.functional.normalize default eps
_EPS2 = _EPS * _EPS   # clamp on *squared* norms in the fused-cosine rewrite


def _round_up(n, m):
    return (n + m - 1) // m * m


def _pad2(a, rows, cols):
    r, c = a.shape
    if r == rows and c == cols:
        return a
    return jnp.pad(a, ((0, rows - r), (0, cols - c)))


@functools.lru_cache(maxsize=1)
def _vmem_capacity_bytes():
    try:
        return int(pltpu.get_tpu_info().vmem_capacity_bytes)
    except Exception:
        return 64 << 20   # conservative fallback (v7x per-core VMEM)


def _single_buffer_kwargs():
    # Buffered(1): constant-index (VMEM-resident) weight blocks get one buffer.
    try:
        mode = pl.Buffered(buffer_count=1)
        pl.BlockSpec((8, 128), lambda c, i: (0, 0), pipeline_mode=mode)
        return {"pipeline_mode": mode}
    except Exception:
        return {}


_RESIDENT_KW = _single_buffer_kwargs()


def _make_kernel(batch_size, block_b, mxu_dtype):
    def kernel(x_ref,
               w1_ref, b1_ref, w2_ref, b2_ref,
               w3_ref, b3_ref, w4_ref, b4_ref,
               out_ref, acc_ref):
        i = pl.program_id(1)
        n_i = pl.num_programs(1)
        tb = block_b

        @pl.when(i == 0)
        def _():
            acc_ref[...] = jnp.zeros_like(acc_ref)

        # Weights/input already stored in the MXU dtype (cast once in the wrapper);
        # biases are f32; accumulation is f32.
        def linear(v, w_ref, b_ref):
            return (jnp.dot(v.astype(mxu_dtype), w_ref[...],
                            preferred_element_type=jnp.float32)
                    + b_ref[...])

        x = x_ref[...]                                       # (2*tb, F_p) fused views
        h = jnp.maximum(linear(x, w1_ref, b1_ref), 0.0)      # projection MLP
        z = linear(h, w2_ref, b2_ref)                        # (2*tb, P_p) f32
        hp = jnp.maximum(linear(z, w3_ref, b3_ref), 0.0)     # prediction MLP
        p = linear(hp, w4_ref, b4_ref)                       # (2*tb, P_p) f32

        # Fused cosine: p_f pairs with z_i and p_i with z_f by swapping the two
        # halves of z via an XLU roll; rsqrt on squared norms (EUP), no divides.
        # eps^2 clamp reproduces the F.normalize(eps) floor exactly.
        z_sw = pltpu.roll(z, shift=tb, axis=0)
        nz_sw = pltpu.roll(jnp.sum(z * z, axis=-1, keepdims=True), shift=tb, axis=0)
        np2 = jnp.sum(p * p, axis=-1, keepdims=True)
        s = jnp.sum(p * z_sw, axis=-1, keepdims=True)
        cos = (s * lax.rsqrt(jnp.maximum(np2, _EPS2))
                 * lax.rsqrt(jnp.maximum(nz_sw, _EPS2)))     # (2*tb, 1)

        # Mask batch-padding rows (fold the view index back into [0, tb)).
        tile = pl.program_id(0) * n_i + i
        r = lax.broadcasted_iota(jnp.int32, (2 * tb, 1), 0)
        r = jnp.where(r >= tb, r - tb, r)
        cos = jnp.where(tile * tb + r < batch_size, cos, 0.0)

        # Deferred reduction: cheap vector accumulate per step, one reduce at the end.
        acc_ref[...] += cos

        @pl.when(i == n_i - 1)
        def _():
            # loss_partial = -sum(cos_fi + cos_if) / (2B) for this core's rows
            out_ref[...] = (jnp.sum(acc_ref[...], axis=0, keepdims=True)
                            * (-0.5 / batch_size))

    return kernel


@functools.partial(jax.jit,
                   static_argnames=("block_b", "mxu_dtype", "vmem_limit"))
def _loss_impl(F_F, F_I, params, *, block_b, mxu_dtype, vmem_limit):
    B, feat = F_F.shape
    hid = params["w1"].shape[1]
    proj = params["w2"].shape[1]

    # Lane-dense padded dims (multiples of 128): full vregs / MXU lanes.
    F_p = _round_up(feat, 128)
    H_p = _round_up(hid, 128)
    P_p = _round_up(proj, 128)

    nb = pl.cdiv(B, block_b)
    nc = 2 if nb >= 2 else 1       # leading "parallel" axis -> 2 TensorCores on v7x
    nbc = pl.cdiv(nb, nc)          # batch tiles per core
    nb_total = nc * nbc
    B_p = nb_total * block_b

    f32 = jnp.float32
    # Pre-fuse the two views in HBM: block t already holds its (2*block_b, F_p)
    # slab, so the kernel never concatenates (one-time XLA op, one DMA stream).
    ff = _pad2(F_F.astype(f32), B_p, F_p).reshape(nb_total, block_b, F_p)
    fi = _pad2(F_I.astype(f32), B_p, F_p).reshape(nb_total, block_b, F_p)
    x = jnp.concatenate([ff, fi], axis=1).astype(mxu_dtype)  # (nb_total, 2*tb, F_p)

    # Cast weights to the MXU dtype once here (not per grid step); biases stay f32.
    w1 = _pad2(params["w1"], F_p, H_p).astype(mxu_dtype)
    w2 = _pad2(params["w2"], H_p, P_p).astype(mxu_dtype)
    w3 = _pad2(params["w3"], P_p, H_p).astype(mxu_dtype)
    w4 = _pad2(params["w4"], H_p, P_p).astype(mxu_dtype)
    b1 = _pad2(params["b1"], 1, H_p).astype(f32)
    b2 = _pad2(params["b2"], 1, P_p).astype(f32)
    b3 = _pad2(params["b3"], 1, H_p).astype(f32)
    b4 = _pad2(params["b4"], 1, P_p).astype(f32)

    x_spec = pl.BlockSpec((None, 2 * block_b, F_p),
                          lambda c, i, n=nbc: (c * n + i, 0, 0))

    def resident(shape):
        # Constant index -> DMA'd once, stays VMEM-resident; single-buffered.
        return pl.BlockSpec(shape, lambda c, i: (0, 0), **_RESIDENT_KW)

    in_specs = [x_spec,
                resident((F_p, H_p)), resident((1, H_p)),
                resident((H_p, P_p)), resident((1, P_p)),
                resident((P_p, H_p)), resident((1, H_p)),
                resident((H_p, P_p)), resident((1, P_p))]

    macs_per_row = F_p * H_p + 2 * H_p * P_p + P_p * H_p
    wbytes = jnp.dtype(mxu_dtype).itemsize
    cost = pl.CostEstimate(
        flops=2 * (2 * B_p) * macs_per_row,                 # both views per row
        transcendentals=4 * B_p,                            # rsqrt per view per row
        bytes_accessed=(wbytes * 2 * B_p * F_p              # fused input
                        + wbytes * macs_per_row             # weights (once)
                        + 4 * 2 * (H_p + P_p)               # biases
                        + 4 * nc))

    out = pl.pallas_call(
        _make_kernel(B, block_b, mxu_dtype),
        out_shape=jax.ShapeDtypeStruct((nc, 1, 1), jnp.float32),
        grid_spec=pltpu.PrefetchScalarGridSpec(
            num_scalar_prefetch=0,
            grid=(nc, nbc),
            in_specs=in_specs,
            out_specs=pl.BlockSpec((None, 1, 1), lambda c, i: (c, 0, 0)),
            scratch_shapes=[pltpu.VMEM((2 * block_b, 1), jnp.float32)]),
        compiler_params=pltpu.CompilerParams(
            dimension_semantics=("parallel", "arbitrary"),  # cores x reduction
            vmem_limit_bytes=vmem_limit),
        cost_estimate=cost,
    )(x, w1, b1, w2, b2, w3, b3, w4, b4)

    return jnp.sum(out)   # per-core partials already carry the -0.5/B scale


def contrastive_learning_loss(F_F, F_I, params, *, block_b=None,
                              mxu_dtype=jnp.bfloat16):
    """SimSiam contrastive loss.

    params: w1,b1,w2,b2 (projection) + w3,b3,w4,b4 (prediction); weights shaped
    (in_dim, out_dim) (transposed vs PyTorch), biases shaped (1, out_dim).
    mxu_dtype=jnp.bfloat16 (default) feeds bf16 to the MXU with f32 accumulation on
    all generations (v5e/v6e/v7x); pass jnp.float32 for a reference-exact path.
    """
    B, feat = F_F.shape
    hid = params["w1"].shape[1]
    proj = params["w2"].shape[1]
    F_p = _round_up(feat, 128)
    H_p = _round_up(hid, 128)
    P_p = _round_up(proj, 128)

    vmem_cap = _vmem_capacity_bytes()
    if block_b is None:
        # Generation-dependent batch tile: bigger where 128 MiB VMEM allows (v5e/v6e),
        # conservative on v7x (64 MiB).
        cap = 512 if vmem_cap >= (96 << 20) else 256
        block_b = min(cap, _round_up(B, 8))
    block_b = max(8, _round_up(int(block_b), 8))

    # Explicit scoped-VMEM budget: resident weights (1 buffer) + biases +
    # double-buffered fused input + f32/cast intermediates + accumulator, + headroom.
    wbytes = jnp.dtype(mxu_dtype).itemsize
    needed = (wbytes * (F_p * H_p + 2 * H_p * P_p + P_p * H_p)
              + 4 * 2 * (H_p + P_p)
              + 2 * wbytes * 2 * block_b * F_p
              + (4 + wbytes) * 2 * block_b * 2 * (H_p + P_p)
              + 4 * 2 * block_b)
    vmem_limit = int(needed * 1.5) + (4 << 20)
    vmem_limit = max(vmem_limit, 16 << 20)
    vmem_limit = min(vmem_limit, max(16 << 20, int(vmem_cap * 0.9)))

    return _loss_impl(F_F, F_I, params, block_b=int(block_b),
                      mxu_dtype=mxu_dtype, vmem_limit=int(vmem_limit))


def init_params(key, feature_dim, projection_dim, hidden_dim):
    """Deterministic synthetic init (PyTorch-style uniform fan-in bound)."""
    def linear_init(k, in_dim, out_dim):
        kw, kb = jax.random.split(k)
        bound = 1.0 / jnp.sqrt(in_dim)
        w = jax.random.uniform(kw, (in_dim, out_dim), jnp.float32, -bound, bound)
        b = jax.random.uniform(kb, (1, out_dim), jnp.float32, -bound, bound)
        return w, b

    k1, k2, k3, k4 = jax.random.split(key, 4)
    w1, b1 = linear_init(k1, feature_dim, hidden_dim)        # projection_mlp[0]
    w2, b2 = linear_init(k2, hidden_dim, projection_dim)     # projection_mlp[2]
    w3, b3 = linear_init(k3, projection_dim, hidden_dim)     # prediction_mlp[0]
    w4, b4 = linear_init(k4, hidden_dim, projection_dim)     # prediction_mlp[2]
    return dict(w1=w1, b1=b1, w2=w2, b2=b2, w3=w3, b3=b3, w4=w4, b4=b4)


def _reference_loss(F_F, F_I, p):
    def proj(x):
        return jnp.maximum(x @ p["w1"] + p["b1"], 0.0) @ p["w2"] + p["b2"]

    def pred(z):
        return jnp.maximum(z @ p["w3"] + p["b3"], 0.0) @ p["w4"] + p["b4"]

    def norm(x):
        return x / jnp.maximum(jnp.linalg.norm(x, axis=-1, keepdims=True), _EPS)

    z_f, z_i = proj(F_F), proj(F_I)
    p_f, p_i = pred(z_f), pred(z_i)
    z_f, z_i, p_f, p_i = norm(z_f), norm(z_i), norm(p_f), norm(p_i)
    return (-jnp.mean(jnp.sum(p_f * z_i, -1)) - jnp.mean(jnp.sum(p_i * z_f, -1))) / 2.0


if __name__ == "__main__":
    B = 12                                        # not a multiple of 8: exercises masking
    feature_dim, projection_dim, hidden_dim = 128, 32, 64

    key = jax.random.PRNGKey(0)
    k_params, k_ff, k_fi = jax.random.split(key, 3)
    params = init_params(k_params, feature_dim, projection_dim, hidden_dim)

    F_F = jax.random.normal(k_ff, (B, feature_dim), jnp.float32)
    F_I = jax.random.normal(k_fi, (B, feature_dim), jnp.float32)

    ref = _reference_loss(F_F, F_I, params)

    # f32 MXU path with block_b=8: multiple batch tiles + both grid "core" rows,
    # tight tolerance vs the f32 reference.
    loss_f32 = jax.block_until_ready(
        contrastive_learning_loss(F_F, F_I, params, block_b=8,
                                  mxu_dtype=jnp.float32))
    assert jnp.allclose(loss_f32, ref, atol=1e-5, rtol=1e-5), (loss_f32, ref)

    # Default bf16 MXU path (looser tolerance: bf16 inputs, f32 accumulation).
    loss_bf16 = jax.block_until_ready(contrastive_learning_loss(F_F, F_I, params))
    assert jnp.allclose(loss_bf16, ref, atol=5e-2, rtol=5e-2), (loss_bf16, ref)

    print("KERNEL_OK")
</pallas_src>

<mosaic_0001>
module attributes {stable_mosaic.version = 11 : i64} {
  func.func @kernel(%arg0: i32, %arg1: i32, %arg2: memref<1x16x128xf32, #tpu.memory_space<vmem>>, %arg3: memref<128x128xf32, #tpu.memory_space<vmem>>, %arg4: memref<1x128xf32, #tpu.memory_space<vmem>>, %arg5: memref<128x128xf32, #tpu.memory_space<vmem>>, %arg6: memref<1x128xf32, #tpu.memory_space<vmem>>, %arg7: memref<128x128xf32, #tpu.memory_space<vmem>>, %arg8: memref<1x128xf32, #tpu.memory_space<vmem>>, %arg9: memref<128x128xf32, #tpu.memory_space<vmem>>, %arg10: memref<1x128xf32, #tpu.memory_space<vmem>>, %arg11: memref<1x1x1xf32, #tpu.memory_space<vmem>>, %arg12: memref<16x1xf32, #tpu.memory_space<vmem>>) attributes {dimension_semantics = [#tpu.dimension_semantics<parallel>, #tpu.dimension_semantics<arbitrary>], iteration_bounds = array<i64: 2, 1>, scalar_prefetch = 0 : i64, scratch_operands = 1 : i64, tpu.core_type = #tpu.core_type<tc>, window_params = [{transform_indices = @transform_0, window_bounds = array<i64: 1, 16, 128>}, {pipeline_mode = #tpu.pipeline_mode<synchronous>, transform_indices = @transform_1, window_bounds = array<i64: 128, 128>}, {pipeline_mode = #tpu.pipeline_mode<synchronous>, transform_indices = @transform_2, window_bounds = array<i64: 1, 128>}, {pipeline_mode = #tpu.pipeline_mode<synchronous>, transform_indices = @transform_3, window_bounds = array<i64: 128, 128>}, {pipeline_mode = #tpu.pipeline_mode<synchronous>, transform_indices = @transform_4, window_bounds = array<i64: 1, 128>}, {pipeline_mode = #tpu.pipeline_mode<synchronous>, transform_indices = @transform_5, window_bounds = array<i64: 128, 128>}, {pipeline_mode = #tpu.pipeline_mode<synchronous>, transform_indices = @transform_6, window_bounds = array<i64: 1, 128>}, {pipeline_mode = #tpu.pipeline_mode<synchronous>, transform_indices = @transform_7, window_bounds = array<i64: 128, 128>}, {pipeline_mode = #tpu.pipeline_mode<synchronous>, transform_indices = @transform_8, window_bounds = array<i64: 1, 128>}, {transform_indices = @transform_9, window_bounds = array<i64: 1, 1, 1>}]} {
    %c0_i32 = arith.constant 0 : i32
    %0 = arith.cmpi eq, %arg1, %c0_i32 : i32
    %1 = arith.extui %0 : i1 to i32
    %c0_i32_0 = arith.constant 0 : i32
    %2 = arith.cmpi ne, %1, %c0_i32_0 : i32
    scf.if %2 {
      %cst_40 = arith.constant 0.000000e+00 : f32
      %69 = vector.broadcast %cst_40 : f32 to vector<16x1xf32>
      %c0_41 = arith.constant 0 : index
      %c0_42 = arith.constant 0 : index
      %70 = vector.load %arg12[%c0_41, %c0_42] : memref<16x1xf32, #tpu.memory_space<vmem>>, vector<16x1xf32>
      tpu.vector_store %arg12[%c0_41, %c0_42], %69 {strides = array<i32>} : memref<16x1xf32, #tpu.memory_space<vmem>>, vector<16x1xf32>,
    } else {
    }
    %c0 = arith.constant 0 : index
    %c0_1 = arith.constant 0 : index
    %c0_2 = arith.constant 0 : index
    %3 = vector.load %arg2[%c0, %c0_1, %c0_2] : memref<1x16x128xf32, #tpu.memory_space<vmem>>, vector<1x16x128xf32>
    %4 = vector.shape_cast %3 : vector<1x16x128xf32> to vector<16x128xf32>
    %c0_3 = arith.constant 0 : index
    %c0_4 = arith.constant 0 : index
    %5 = vector.load %arg3[%c0_3, %c0_4] : memref<128x128xf32, #tpu.memory_space<vmem>>, vector<128x128xf32>
    %cst = arith.constant dense<0.000000e+00> : vector<16x128xf32>
    %6 = tpu.matmul %4, %5, %cst {dimension_numbers = #tpu.dot_dimension_numbers<[1], [0], [0], [1], [0, 0, 1, 1], [], []>} : vector<16x128xf32>, vector<128x128xf32>, vector<16x128xf32> -> vector<16x128xf32>
    %c0_5 = arith.constant 0 : index
    %c0_6 = arith.constant 0 : index
    %7 = vector.load %arg4[%c0_5, %c0_6] : memref<1x128xf32, #tpu.memory_space<vmem>>, vector<1x128xf32>
    %8 = vector.broadcast %7 : vector<1x128xf32> to vector<16x128xf32>
    %9 = arith.addf %6, %8 : vector<16x128xf32>
    %cst_7 = arith.constant 0.000000e+00 : f32
    %10 = vector.broadcast %cst_7 : f32 to vector<16x128xf32>
    %11 = arith.maximumf %9, %10 : vector<16x128xf32>
    %c0_8 = arith.constant 0 : index
    %c0_9 = arith.constant 0 : index
    %12 = vector.load %arg5[%c0_8, %c0_9] : memref<128x128xf32, #tpu.memory_space<vmem>>, vector<128x128xf32>
    %cst_10 = arith.constant dense<0.000000e+00> : vector<16x128xf32>
    %13 = tpu.matmul %11, %12, %cst_10 {dimension_numbers = #tpu.dot_dimension_numbers<[1], [0], [0], [1], [0, 0, 1, 1], [], []>} : vector<16x128xf32>, vector<128x128xf32>, vector<16x128xf32> -> vector<16x128xf32>
    %c0_11 = arith.constant 0 : index
    %c0_12 = arith.constant 0 : index
    %14 = vector.load %arg6[%c0_11, %c0_12] : memref<1x128xf32, #tpu.memory_space<vmem>>, vector<1x128xf32>
    %15 = vector.broadcast %14 : vector<1x128xf32> to vector<16x128xf32>
    %16 = arith.addf %13, %15 : vector<16x128xf32>
    %c0_13 = arith.constant 0 : index
    %c0_14 = arith.constant 0 : index
    %17 = vector.load %arg7[%c0_13, %c0_14] : memref<128x128xf32, #tpu.memory_space<vmem>>, vector<128x128xf32>
    %cst_15 = arith.constant dense<0.000000e+00> : vector<16x128xf32>
    %18 = tpu.matmul %16, %17, %cst_15 {dimension_numbers = #tpu.dot_dimension_numbers<[1], [0], [0], [1], [0, 0, 1, 1], [], []>} : vector<16x128xf32>, vector<128x128xf32>, vector<16x128xf32> -> vector<16x128xf32>
    %c0_16 = arith.constant 0 : index
    %c0_17 = arith.constant 0 : index
    %19 = vector.load %arg8[%c0_16, %c0_17] : memref<1x128xf32, #tpu.memory_space<vmem>>, vector<1x128xf32>
    %20 = vector.broadcast %19 : vector<1x128xf32> to vector<16x128xf32>
    %21 = arith.addf %18, %20 : vector<16x128xf32>
    %cst_18 = arith.constant 0.000000e+00 : f32
    %22 = vector.broadcast %cst_18 : f32 to vector<16x128xf32>
    %23 = arith.maximumf %21, %22 : vector<16x128xf32>
    %c0_19 = arith.constant 0 : index
    %c0_20 = arith.constant 0 : index
    %24 = vector.load %arg9[%c0_19, %c0_20] : memref<128x128xf32, #tpu.memory_space<vmem>>, vector<128x128xf32>
    %cst_21 = arith.constant dense<0.000000e+00> : vector<16x128xf32>
    %25 = tpu.matmul %23, %24, %cst_21 {dimension_numbers = #tpu.dot_dimension_numbers<[1], [0], [0], [1], [0, 0, 1, 1], [], []>} : vector<16x128xf32>, vector<128x128xf32>, vector<16x128xf32> -> vector<16x128xf32>
    %c0_22 = arith.constant 0 : index
    %c0_23 = arith.constant 0 : index
    %26 = vector.load %arg10[%c0_22, %c0_23] : memref<1x128xf32, #tpu.memory_space<vmem>>, vector<1x128xf32>
    %27 = vector.broadcast %26 : vector<1x128xf32> to vector<16x128xf32>
    %28 = arith.addf %25, %27 : vector<16x128xf32>
    %c8_i32 = arith.constant 8 : i32
    %29 = tpu.dynamic_rotate %16 by %c8_i32 dim 0 : vector<16x128xf32>, i32 -> vector<16x128xf32>
    %30 = arith.mulf %16, %16 : vector<16x128xf32>
    %cst_24 = arith.constant dense<0.000000e+00> : vector<16xf32>
    %31 = vector.multi_reduction <add>, %30, %cst_24 [1] : vector<16x128xf32> to vector<16xf32>
    %32 = vector.shape_cast %31 : vector<16xf32> to vector<16x1xf32>
    %c8_i32_25 = arith.constant 8 : i32
    %33 = tpu.dynamic_rotate %32 by %c8_i32_25 dim 0 : vector<16x1xf32>, i32 -> vector<16x1xf32>
    %34 = arith.mulf %28, %28 : vector<16x128xf32>
    %cst_26 = arith.constant dense<0.000000e+00> : vector<16xf32>
    %35 = vector.multi_reduction <add>, %34, %cst_26 [1] : vector<16x128xf32> to vector<16xf32>
    %36 = vector.shape_cast %35 : vector<16xf32> to vector<16x1xf32>
    %37 = arith.mulf %28, %29 : vector<16x128xf32>
    %cst_27 = arith.constant dense<0.000000e+00> : vector<16xf32>
    %38 = vector.multi_reduction <add>, %37, %cst_27 [1] : vector<16x128xf32> to vector<16xf32>
    %39 = vector.shape_cast %38 : vector<16xf32> to vector<16x1xf32>
    %cst_28 = arith.constant 1.000000e-24 : f32
    %40 = vector.broadcast %cst_28 : f32 to vector<16x1xf32>
    %41 = arith.maximumf %36, %40 : vector<16x1xf32>
    %42 = math.rsqrt %41 : vector<16x1xf32>
    %43 = arith.mulf %39, %42 : vector<16x1xf32>
    %cst_29 = arith.constant 1.000000e-24 : f32
    %44 = vector.broadcast %cst_29 : f32 to vector<16x1xf32>
    %45 = arith.maximumf %33, %44 : vector<16x1xf32>
    %46 = math.rsqrt %45 : vector<16x1xf32>
    %47 = arith.mulf %43, %46 : vector<16x1xf32>
    %c1_i32 = arith.constant 1 : i32
    %48 = arith.muli %arg0, %c1_i32 : i32
    %49 = arith.addi %48, %arg1 : i32
    %50 = tpu.iota {dimensions = array<i32: 0>} : vector<16x1xi32>
    %c8_i32_30 = arith.constant 8 : i32
    %51 = vector.broadcast %c8_i32_30 : i32 to vector<16x1xi32>
    %52 = arith.cmpi sge, %50, %51 : vector<16x1xi32>
    %c8_i32_31 = arith.constant 8 : i32
    %53 = vector.broadcast %c8_i32_31 : i32 to vector<16x1xi32>
    %54 = arith.subi %50, %53 : vector<16x1xi32>
    %55 = arith.select %52, %54, %50 : vector<16x1xi1>, vector<16x1xi32>
    %c8_i32_32 = arith.constant 8 : i32
    %56 = arith.muli %49, %c8_i32_32 : i32
    %57 = vector.broadcast %56 : i32 to vector<16x1xi32>
    %58 = arith.addi %57, %55 : vector<16x1xi32>
    %c12_i32 = arith.constant 12 : i32
    %59 = vector.broadcast %c12_i32 : i32 to vector<16x1xi32>
    %60 = arith.cmpi slt, %58, %59 : vector<16x1xi32>
    %cst_33 = arith.constant 0.000000e+00 : f32
    %61 = vector.broadcast %cst_33 : f32 to vector<16x1xf32>
    %62 = arith.select %60, %47, %61 : vector<16x1xi1>, vector<16x1xf32>
    %c0_34 = arith.constant 0 : index
    %c0_35 = arith.constant 0 : index
    %63 = vector.load %arg12[%c0_34, %c0_35] : memref<16x1xf32, #tpu.memory_space<vmem>>, vector<16x1xf32>
    %64 = arith.addf %63, %62 : vector<16x1xf32>
    %c0_36 = arith.constant 0 : index
    %c0_37 = arith.constant 0 : index
    %65 = vector.load %arg12[%c0_36, %c0_37] : memref<16x1xf32, #tpu.memory_space<vmem>>, vector<16x1xf32>
    tpu.vector_store %arg12[%c0_36, %c0_37], %64 {strides = array<i32>} : memref<16x1xf32, #tpu.memory_space<vmem>>, vector<16x1xf32>,
    %c0_i32_38 = arith.constant 0 : i32
    %66 = arith.cmpi eq, %arg1, %c0_i32_38 : i32
    %67 = arith.extui %66 : i1 to i32
    %c0_i32_39 = arith.constant 0 : i32
    %68 = arith.cmpi ne, %67, %c0_i32_39 : i32
    scf.if %68 {
      %c0_40 = arith.constant 0 : index
      %c0_41 = arith.constant 0 : index
      %69 = vector.load %arg12[%c0_40, %c0_41] : memref<16x1xf32, #tpu.memory_space<vmem>>, vector<16x1xf32>
      %cst_42 = arith.constant dense<0.000000e+00> : vector<1xf32>
      %70 = vector.multi_reduction <add>, %69, %cst_42 [0] : vector<16x1xf32> to vector<1xf32>
      %71 = vector.shape_cast %70 : vector<1xf32> to vector<1x1xf32>
      %cst_43 = arith.constant -0.0416666679 : f32
      %72 = vector.broadcast %cst_43 : f32 to vector<1x1xf32>
      %73 = arith.mulf %71, %72 : vector<1x1xf32>
      %c0_44 = arith.constant 0 : index
      %c0_45 = arith.constant 0 : index
      %c0_46 = arith.constant 0 : index
      %74 = vector.load %arg11[%c0_44, %c0_45, %c0_46] : memref<1x1x1xf32, #tpu.memory_space<vmem>>, vector<1x1x1xf32>
      %75 = vector.shape_cast %74 : vector<1x1x1xf32> to vector<1x1xf32>
      %76 = vector.shape_cast %73 : vector<1x1xf32> to vector<1x1x1xf32>
      tpu.vector_store %arg11[%c0_44, %c0_45, %c0_46], %76 {strides = array<i32>} : memref<1x1x1xf32, #tpu.memory_space<vmem>>, vector<1x1x1xf32>,
    } else {
    }
    return
  }
  func.func @transform_0(%arg0: i32, %arg1: i32) -> (i32, i32, i32) {
    %c1_i32 = arith.constant 1 : i32
    %0 = arith.muli %arg0, %c1_i32 : i32
    %1 = arith.addi %0, %arg1 : i32
    %c0_i32 = arith.constant 0 : i32
    %c0_i32_0 = arith.constant 0 : i32
    %c0_i32_1 = arith.constant 0 : i32
    return %1, %c0_i32, %c0_i32_0 : i32, i32, i32
  }
  func.func @transform_1(%arg0: i32, %arg1: i32) -> (i32, i32) {
    %c0_i32 = arith.constant 0 : i32
    %c0_i32_0 = arith.constant 0 : i32
    %c0_i32_1 = arith.constant 0 : i32
    return %c0_i32, %c0_i32_0 : i32, i32
  }
  func.func @transform_2(%arg0: i32, %arg1: i32) -> (i32, i32) {
    %c0_i32 = arith.constant 0 : i32
    %c0_i32_0 = arith.constant 0 : i32
    %c0_i32_1 = arith.constant 0 : i32
    return %c0_i32, %c0_i32_0 : i32, i32
  }
  func.func @transform_3(%arg0: i32, %arg1: i32) -> (i32, i32) {
    %c0_i32 = arith.constant 0 : i32
    %c0_i32_0 = arith.constant 0 : i32
    %c0_i32_1 = arith.constant 0 : i32
    return %c0_i32, %c0_i32_0 : i32, i32
  }
  func.func @transform_4(%arg0: i32, %arg1: i32) -> (i32, i32) {
    %c0_i32 = arith.constant 0 : i32
    %c0_i32_0 = arith.constant 0 : i32
    %c0_i32_1 = arith.constant 0 : i32
    return %c0_i32, %c0_i32_0 : i32, i32
  }
  func.func @transform_5(%arg0: i32, %arg1: i32) -> (i32, i32) {
    %c0_i32 = arith.constant 0 : i32
    %c0_i32_0 = arith.constant 0 : i32
    %c0_i32_1 = arith.constant 0 : i32
    return %c0_i32, %c0_i32_0 : i32, i32
  }
  func.func @transform_6(%arg0: i32, %arg1: i32) -> (i32, i32) {
    %c0_i32 = arith.constant 0 : i32
    %c0_i32_0 = arith.constant 0 : i32
    %c0_i32_1 = arith.constant 0 : i32
    return %c0_i32, %c0_i32_0 : i32, i32
  }
  func.func @transform_7(%arg0: i32, %arg1: i32) -> (i32, i32) {
    %c0_i32 = arith.constant 0 : i32
    %c0_i32_0 = arith.constant 0 : i32
    %c0_i32_1 = arith.constant 0 : i32
    return %c0_i32, %c0_i32_0 : i32, i32
  }
  func.func @transform_8(%arg0: i32, %arg1: i32) -> (i32, i32) {
    %c0_i32 = arith.constant 0 : i32
    %c0_i32_0 = arith.constant 0 : i32
    %c0_i32_1 = arith.constant 0 : i32
    return %c0_i32, %c0_i32_0 : i32, i32
  }
  func.func @transform_9(%arg0: i32, %arg1: i32) -> (i32, i32, i32) {
    %c0_i32 = arith.constant 0 : i32
    %c0_i32_0 = arith.constant 0 : i32
    %c0_i32_1 = arith.constant 0 : i32
    return %arg0, %c0_i32, %c0_i32_0 : i32, i32, i32
  }
}

</mosaic_0001>

<llo_original>
// kernel: _loss_impl.1
$region0: #{_loss_impl.1}
  #allocation0 [shape = 'u32[]', space=smem, size = 0x4, offset = 0x4, fixed_abs, tag = 'smem constant byte address 0x4 - core index']
  #allocation1 [shape = 'u32[144,128]{1,0:T(1,128)}', space=vmem, size = 0x12000, scoped, tag = 'internal scratch']
  #allocation2 [shape = 'f32[16,1]{1,0:T(8,128)}', space=vmem, size = 0x2000, scoped, tag = 'scratch operand']
  %s0 = inlined_call_operand.vmem [shape: f32[2,16,128], index: 0, kind: input, shape index: {}]
  %s1 = inlined_call_operand.vmem [shape: f32[128,128], index: 1, kind: input, shape index: {}]
  %s2 = inlined_call_operand.vmem [shape: f32[1,128], index: 2, kind: input, shape index: {}]
  %s3 = inlined_call_operand.vmem [shape: f32[128,128], index: 3, kind: input, shape index: {}]
  %s4 = inlined_call_operand.vmem [shape: f32[1,128], index: 4, kind: input, shape index: {}]
  %s5 = inlined_call_operand.vmem [shape: f32[128,128], index: 5, kind: input, shape index: {}]
  %s6 = inlined_call_operand.vmem [shape: f32[1,128], index: 6, kind: input, shape index: {}]
  %s7 = inlined_call_operand.vmem [shape: f32[128,128], index: 7, kind: input, shape index: {}]
  %s8 = inlined_call_operand.vmem [shape: f32[1,128], index: 8, kind: input, shape index: {}]
  %s9 = inlined_call_operand.vmem [shape: f32[2,1,1], index: 9, kind: output, shape index: {}]
  %s10 = sld [smem:[#allocation0]]
  $region77: #{_loss_impl.1} parent=0
    _
  %s12 = ssub.s32 1, %s10
  %s13 = scalar_select 0, %s12, %s10
  loop: start=0, step=1, limit=4
  $region2: #{_loss_impl.1} parent=0 // loop_pre_header
    _
  $region3: #{_loss_impl.1} parent=0 // loop_header
    %s15 = sphi 0, %s19
    %p16 = scmp.ge.s32.totalorder %s15, 4
    %s22 = sphi 0, %s34
    %s23 = sphi 0, %s30
    %s24 = sphi 0, %s22
    %s25 = sphi 0, %s23
    %s26 = sphi 0, %s24
    %s27 = sphi 0, %s25
    %s39 = sphi 0, %s41
    %s42 = sphi 0, %s39
    %s43 = sphi 0, %s42
    %s59 = sphi 0, %s43
    %s63 = sphi 0, %s63
    %s65 = sphi 0, %s63
    %s66 = sphi 0, %s65
    %s80 = sphi 0, %s66
    %s84 = sphi 0, %s84
    %s86 = sphi 0, %s84
    %s87 = sphi 0, %s86
    %s101 = sphi 0, %s87
    %s105 = sphi 0, %s105
    %s107 = sphi 0, %s105
    %s108 = sphi 0, %s107
    %s122 = sphi 0, %s108
    %s126 = sphi 0, %s126
    %s128 = sphi 0, %s126
    %s129 = sphi 0, %s128
    %s143 = sphi 0, %s129
    %s147 = sphi 0, %s147
    %s149 = sphi 0, %s147
    %s150 = sphi 0, %s149
    %s164 = sphi 0, %s150
    %s168 = sphi 0, %s168
    %s170 = sphi 0, %s168
    %s171 = sphi 0, %s170
    %s185 = sphi 0, %s171
    %s189 = sphi 0, %s189
    %s191 = sphi 0, %s189
    %s192 = sphi 0, %s191
    %s206 = sphi 0, %s192
    %s210 = sphi 0, %s210
    %s212 = sphi 0, %s210
    %s213 = sphi 0, %s212
    %s227 = sphi 0, %s213
    %s233 = sphi 0, %s235
    %s236 = sphi 0, %s233
    %s237 = sphi 0, %s236
    %s253 = sphi 0, %s237
  $region4: #{_loss_impl.1} parent=0 // loop_header_branch
    %18 = sbr.rel (%p16) target = $region8
  $region5: #{_loss_impl.1} parent=0 // loop_body
    %s20 = ssub.s32 %s15, 1
    %s21 = ssub.s32 %s15, 2
    %s28 = sadd.s32 1, %s23
    %p29 = scmp.ge.s32.totalorder %s28, 1
    %s30 = scalar_select %p29, 0, %s28
    %s31 = sadd.s32 1, %s22
    %s32 = scalar_select %p29, %s31, %s22
    %p33 = scmp.ge.s32.totalorder %s32, 2
    %s34 = scalar_select %p33, 0, %s32
    %s35 = sadd.s32 %s22, %s23
    %s36 = sadd.s32 %s34, %s30
    %s37 = ssub.s32 %s35, %s36
    %p38 = scmp.eq.s32.totalorder %s37, 0
    %s40 = sadd.s32 %s39, 1
    %s41 = scalar_select %p38, %s39, %s40
    %p44 = pneg %p38
    %p45 = scmp.eq.s32.totalorder %s15, 1
    %p46 = por %p44, %p45
    %p47 = scmp.ne.s32.totalorder %s39, %s42
    %p48 = scmp.eq.s32.totalorder %s15, 0
    %p49 = por %p47, %p48
    %p50 = scmp.ne.s32.totalorder %s39, %s42
    %p51 = scmp.eq.s32.totalorder %s20, 1
    %p52 = por %p50, %p51
    %p53 = scmp.ne.s32.totalorder %s42, %s43
    %p54 = scmp.eq.s32.totalorder %s20, 0
    %p55 = por %p53, %p54
    %p56 = scmp.ne.s32.totalorder %s42, %s43
    %p57 = scmp.eq.s32.totalorder %s21, 1
    %p58 = por %p56, %p57
    %p60 = scmp.ne.s32.totalorder %s43, %s59
    %p61 = scmp.eq.s32.totalorder %s21, 0
    %p62 = por %p60, %p61
    %s64 = sadd.s32 %s63, 1
    %p67 = scmp.eq.s32.totalorder %s15, 1
    %p68 = scmp.ne.s32.totalorder %s63, %s65
    %p69 = scmp.eq.s32.totalorder %s15, 0
    %p70 = por %p68, %p69
    %p71 = scmp.ne.s32.totalorder %s63, %s65
    %p72 = scmp.eq.s32.totalorder %s20, 1
    %p73 = por %p71, %p72
    %p74 = scmp.ne.s32.totalorder %s65, %s66
    %p75 = scmp.eq.s32.totalorder %s20, 0
    %p76 = por %p74, %p75
    %p77 = scmp.ne.s32.totalorder %s65, %s66
    %p78 = scmp.eq.s32.totalorder %s21, 1
    %p79 = por %p77, %p78
    %p81 = scmp.ne.s32.totalorder %s66, %s80
    %p82 = scmp.eq.s32.totalorder %s21, 0
    %p83 = por %p81, %p82
    %s85 = sadd.s32 %s84, 1
    %p88 = scmp.eq.s32.totalorder %s15, 1
    %p89 = scmp.ne.s32.totalorder %s84, %s86
    %p90 = scmp.eq.s32.totalorder %s15, 0
    %p91 = por %p89, %p90
    %p92 = scmp.ne.s32.totalorder %s84, %s86
    %p93 = scmp.eq.s32.totalorder %s20, 1
    %p94 = por %p92, %p93
    %p95 = scmp.ne.s32.totalorder %s86, %s87
    %p96 = scmp.eq.s32.totalorder %s20, 0
    %p97 = por %p95, %p96
    %p98 = scmp.ne.s32.totalorder %s86, %s87
    %p99 = scmp.eq.s32.totalorder %s21, 1
    %p100 = por %p98, %p99
    %p102 = scmp.ne.s32.totalorder %s87, %s101
    %p103 = scmp.eq.s32.totalorder %s21, 0
    %p104 = por %p102, %p103
    %s106 = sadd.s32 %s105, 1
    %p109 = scmp.eq.s32.totalorder %s15, 1
    %p110 = scmp.ne.s32.totalorder %s105, %s107
    %p111 = scmp.eq.s32.totalorder %s15, 0
    %p112 = por %p110, %p111
    %p113 = scmp.ne.s32.totalorder %s105, %s107
    %p114 = scmp.eq.s32.totalorder %s20, 1
    %p115 = por %p113, %p114
    %p116 = scmp.ne.s32.totalorder %s107, %s108
    %p117 = scmp.eq.s32.totalorder %s20, 0
    %p118 = por %p116, %p117
    %p119 = scmp.ne.s32.totalorder %s107, %s108
    %p120 = scmp.eq.s32.totalorder %s21, 1
    %p121 = por %p119, %p120
    %p123 = scmp.ne.s32.totalorder %s108, %s122
    %p124 = scmp.eq.s32.totalorder %s21, 0
    %p125 = por %p123, %p124
    %s127 = sadd.s32 %s126, 1
    %p130 = scmp.eq.s32.totalorder %s15, 1
    %p131 = scmp.ne.s32.totalorder %s126, %s128
    %p132 = scmp.eq.s32.totalorder %s15, 0
    %p133 = por %p131, %p132
    %p134 = scmp.ne.s32.totalorder %s126, %s128
    %p135 = scmp.eq.s32.totalorder %s20, 1
    %p136 = por %p134, %p135
    %p137 = scmp.ne.s32.totalorder %s128, %s129
    %p138 = scmp.eq.s32.totalorder %s20, 0
    %p139 = por %p137, %p138
    %p140 = scmp.ne.s32.totalorder %s128, %s129
    %p141 = scmp.eq.s32.totalorder %s21, 1
    %p142 = por %p140, %p141
    %p144 = scmp.ne.s32.totalorder %s129, %s143
    %p145 = scmp.eq.s32.totalorder %s21, 0
    %p146 = por %p144, %p145
    %s148 = sadd.s32 %s147, 1
    %p151 = scmp.eq.s32.totalorder %s15, 1
    %p152 = scmp.ne.s32.totalorder %s147, %s149
    %p153 = scmp.eq.s32.totalorder %s15, 0
    %p154 = por %p152, %p153
    %p155 = scmp.ne.s32.totalorder %s147, %s149
    %p156 = scmp.eq.s32.totalorder %s20, 1
    %p157 = por %p155, %p156
    %p158 = scmp.ne.s32.totalorder %s149, %s150
    %p159 = scmp.eq.s32.totalorder %s20, 0
    %p160 = por %p158, %p159
    %p161 = scmp.ne.s32.totalorder %s149, %s150
    %p162 = scmp.eq.s32.totalorder %s21, 1
    %p163 = por %p161, %p162
    %p165 = scmp.ne.s32.totalorder %s150, %s164
    %p166 = scmp.eq.s32.totalorder %s21, 0
    %p167 = por %p165, %p166
    %s169 = sadd.s32 %s168, 1
    %p172 = scmp.eq.s32.totalorder %s15, 1
    %p173 = scmp.ne.s32.totalorder %s168, %s170
    %p174 = scmp.eq.s32.totalorder %s15, 0
    %p175 = por %p173, %p174
    %p176 = scmp.ne.s32.totalorder %s168, %s170
    %p177 = scmp.eq.s32.totalorder %s20, 1
    %p178 = por %p176, %p177
    %p179 = scmp.ne.s32.totalorder %s170, %s171
    %p180 = scmp.eq.s32.totalorder %s20, 0
    %p181 = por %p179, %p180
    %p182 = scmp.ne.s32.totalorder %s170, %s171
    %p183 = scmp.eq.s32.totalorder %s21, 1
    %p184 = por %p182, %p183
    %p186 = scmp.ne.s32.totalorder %s171, %s185
    %p187 = scmp.eq.s32.totalorder %s21, 0
    %p188 = por %p186, %p187
    %s190 = sadd.s32 %s189, 1
    %p193 = scmp.eq.s32.totalorder %s15, 1
    %p194 = scmp.ne.s32.totalorder %s189, %s191
    %p195 = scmp.eq.s32.totalorder %s15, 0
    %p196 = por %p194, %p195
    %p197 = scmp.ne.s32.totalorder %s189, %s191
    %p198 = scmp.eq.s32.totalorder %s20, 1
    %p199 = por %p197, %p198
    %p200 = scmp.ne.s32.totalorder %s191, %s192
    %p201 = scmp.eq.s32.totalorder %s20, 0
    %p202 = por %p200, %p201
    %p203 = scmp.ne.s32.totalorder %s191, %s192
    %p204 = scmp.eq.s32.totalorder %s21, 1
    %p205 = por %p203, %p204
    %p207 = scmp.ne.s32.totalorder %s192, %s206
    %p208 = scmp.eq.s32.totalorder %s21, 0
    %p209 = por %p207, %p208
    %s211 = sadd.s32 %s210, 1
    %p214 = scmp.eq.s32.totalorder %s15, 1
    %p215 = scmp.ne.s32.totalorder %s210, %s212
    %p216 = scmp.eq.s32.totalorder %s15, 0
    %p217 = por %p215, %p216
    %p218 = scmp.ne.s32.totalorder %s210, %s212
    %p219 = scmp.eq.s32.totalorder %s20, 1
    %p220 = por %p218, %p219
    %p221 = scmp.ne.s32.totalorder %s212, %s213
    %p222 = scmp.eq.s32.totalorder %s20, 0
    %p223 = por %p221, %p222
    %p224 = scmp.ne.s32.totalorder %s212, %s213
    %p225 = scmp.eq.s32.totalorder %s21, 1
    %p226 = por %p224, %p225
    %p228 = scmp.ne.s32.totalorder %s213, %s227
    %p229 = scmp.eq.s32.totalorder %s21, 0
    %p230 = por %p228, %p229
    %s231 = ssub.s32 %s22, %s34
    %p232 = scmp.eq.s32.totalorder %s231, 0
    %s234 = sadd.s32 %s233, 1
    %s235 = scalar_select %p232, %s233, %s234
    %p238 = pneg %p232
    %p239 = scmp.eq.s32.totalorder %s15, 1
    %p240 = por %p238, %p239
    %p241 = scmp.ne.s32.totalorder %s233, %s236
    %p242 = scmp.eq.s32.totalorder %s15, 0
    %p243 = por %p241, %p242
    %p244 = scmp.ne.s32.totalorder %s233, %s236
    %p245 = scmp.eq.s32.totalorder %s20, 1
    %p246 = por %p244, %p245
    %p247 = scmp.ne.s32.totalorder %s236, %s237
    %p248 = scmp.eq.s32.totalorder %s20, 0
    %p249 = por %p247, %p248
    %p250 = scmp.ne.s32.totalorder %s236, %s237
    %p251 = scmp.eq.s32.totalorder %s21, 1
    %p252 = por %p250, %p251
    %p254 = scmp.ne.s32.totalorder %s237, %s253
    %p255 = scmp.eq.s32.totalorder %s21, 0
    %p256 = por %p254, %p255
    %p257 = scmp.le.s32.totalorder 1, %s15
    %p258 = scmp.lt.s32.totalorder %s15, 3
    %p259 = pnand %p257, %p258
    %p260 = pneg %p259
    // Predicated region
    $region9: #{_loss_impl.1} parent=5 // pred_check
      _
    $region10: #{_loss_impl.1} parent=5 // pred_check_branch
      %262 = sbr.rel (%p259) target = $region12
    $region11: #{_loss_impl.1} parent=5 // pred_region
      %s263 = ssub.s32 %s15, 1
      // Predicated region
      $region13: #{_loss_impl.1} parent=11 // pred_check
        %p264 = pneg %p76
      $region14: #{_loss_impl.1} parent=11 // pred_check_branch
        %266 = sbr.rel (%p264) target = $region16
      $region15: #{_loss_impl.1} parent=11 // pred_region
        _
      $region16: #{_loss_impl.1} parent=11 // pred_fallthru
        _
      // Predicated region
      $region17: #{_loss_impl.1} parent=11 // pred_check
        %p267 = pneg %p97
      $region18: #{_loss_impl.1} parent=11 // pred_check_branch
        %269 = sbr.rel (%p267) target = $region20
      $region19: #{_loss_impl.1} parent=11 // pred_region
        _
      $region20: #{_loss_impl.1} parent=11 // pred_fallthru
        _
      // Predicated region
      $region21: #{_loss_impl.1} parent=11 // pred_check
        %p270 = pneg %p118
      $region22: #{_loss_impl.1} parent=11 // pred_check_branch
        %272 = sbr.rel (%p270) target = $region24
      $region23: #{_loss_impl.1} parent=11 // pred_region
        _
      $region24: #{_loss_impl.1} parent=11 // pred_fallthru
        _
      // Predicated region
      $region25: #{_loss_impl.1} parent=11 // pred_check
        %p273 = pneg %p139
      $region26: #{_loss_impl.1} parent=11 // pred_check_branch
        %275 = sbr.rel (%p273) target = $region28
      $region27: #{_loss_impl.1} parent=11 // pred_region
        _
      $region28: #{_loss_impl.1} parent=11 // pred_fallthru
        _
      // Predicated region
      $region29: #{_loss_impl.1} parent=11 // pred_check
        %p276 = pneg %p160
      $region30: #{_loss_impl.1} parent=11 // pred_check_branch
        %278 = sbr.rel (%p276) target = $region32
      $region31: #{_loss_impl.1} parent=11 // pred_region
        _
      $region32: #{_loss_impl.1} parent=11 // pred_fallthru
        _
      // Predicated region
      $region33: #{_loss_impl.1} parent=11 // pred_check
        %p279 = pneg %p181
      $region34: #{_loss_impl.1} parent=11 // pred_check_branch
        %281 = sbr.rel (%p279) target = $region36
      $region35: #{_loss_impl.1} parent=11 // pred_region
        _
      $region36: #{_loss_impl.1} parent=11 // pred_fallthru
        _
      // Predicated region
      $region37: #{_loss_impl.1} parent=11 // pred_check
        %p282 = pneg %p202
      $region38: #{_loss_impl.1} parent=11 // pred_check_branch
        %284 = sbr.rel (%p282) target = $region40
      $region39: #{_loss_impl.1} parent=11 // pred_region
        _
      $region40: #{_loss_impl.1} parent=11 // pred_fallthru
        _
      // Predicated region
      $region41: #{_loss_impl.1} parent=11 // pred_check
        %p285 = pneg %p223
      $region42: #{_loss_impl.1} parent=11 // pred_check_branch
        %287 = sbr.rel (%p285) target = $region44
      $region43: #{_loss_impl.1} parent=11 // pred_region
        _
      $region44: #{_loss_impl.1} parent=11 // pred_fallthru
        _
    $region12: #{_loss_impl.1} parent=5 // pred_fallthru
      _
    %p288 = scmp.lt.s32.totalorder %s15, 2
    // Predicated region
    $region45: #{_loss_impl.1} parent=5 // pred_check
      %p289 = pneg %p288
    $region46: #{_loss_impl.1} parent=5 // pred_check_branch
      %291 = sbr.rel (%p289) target = $region48
    $region47: #{_loss_impl.1} parent=5 // pred_region
      // Predicated region
      $region49: #{_loss_impl.1} parent=47 // pred_check
        %p292 = pneg %p49
      $region50: #{_loss_impl.1} parent=47 // pred_check_branch
        %294 = sbr.rel (%p292) target = $region52
      $region51: #{_loss_impl.1} parent=47 // pred_region
        %s295 = sadd.s32 %s22, %s23
        %p296 = scmp.lt.s32.totalorder %s295, 1
        %s297 = scalar_select %p296, %s295, 1
        %s298 = smul.addr %s297, 2
        %s299 = smul.addr %s298, 8
        %s300 = scalar_lea.vmem %s0, %s299
        %s301 = sadd.s32 %s22, %s23
      $region52: #{_loss_impl.1} parent=47 // pred_fallthru
        _
    $region48: #{_loss_impl.1} parent=5 // pred_fallthru
      _
    %p302 = scmp.le.s32.totalorder 1, %s15
    %p303 = scmp.lt.s32.totalorder %s15, 3
    %p304 = pnand %p302, %p303
    %p305 = pneg %p304
    // Predicated region
    $region53: #{_loss_impl.1} parent=5 // pred_check
      _
    $region54: #{_loss_impl.1} parent=5 // pred_check_branch
      %307 = sbr.rel (%p304) target = $region56
    $region55: #{_loss_impl.1} parent=5 // pred_region
      %s308 = ssub.s32 %s15, 1
      %s309 = sadd.s32 %s24, %s25
      %p310 = scmp.lt.s32.totalorder %s309, 1
      %s311 = scalar_select %p310, %s309, 1
      %s312 = smul.addr %s311, 2
      %s313 = smul.addr %s312, 8
      %s314 = scalar_lea.vmem %s0, %s313
      %p315 = pneg %p55
      %p316 = pneg %p52
      %p317 = pneg %p76
      %p318 = pneg %p73
      %p319 = pneg %p97
      %p320 = pneg %p94
      %p321 = pneg %p118
      %p322 = pneg %p115
      %p323 = pneg %p139
      %p324 = pneg %p136
      %p325 = pneg %p160
      %p326 = pneg %p157
      %p327 = pneg %p181
      %p328 = pneg %p178
      %p329 = pneg %p202
      %p330 = pneg %p199
      %p331 = pneg %p223
      %p332 = pneg %p220
      %p333 = pneg %p249
      %p334 = pneg %p246
      %p335 = scmp.lt.s32.totalorder %s24, 1
      %s336 = scalar_select %p335, %s24, 1
      %s337 = scalar_lea.vmem %s9, %s336
      %s338 = sadd.s32 %s24, %s25
      %p339 = scmp.lt.s32.totalorder %s338, 1
      %s340 = scalar_select %p339, %s338, 1
      %s341 = smul.addr %s340, 2
      %s342 = smul.addr %s341, 8
      %s343 = scalar_lea.vmem %s0, %s342
      %s344 = sadd.s32 %s24, %s25
      %p345 = scmp.lt.s32.totalorder %s24, 1
      %s346 = scalar_select %p345, %s24, 1
      %s347 = scalar_lea.vmem %s9, %s346
      %p348 = scmp.eq.s32.totalorder %s25, 0
      // Predicated region
      $region57: #{_loss_impl.1} parent=55 // pred_check
        %p349 = pneg %p348
      $region58: #{_loss_impl.1} parent=55 // pred_check_branch
        %351 = sbr.rel (%p349) target = $region60
      $region59: #{_loss_impl.1} parent=55 // pred_region
        %vm352 = vcmask 7168
        %353 = vst.msk [vmem:[#allocation2] sm:$0xff] %vm352, 0.0
        %354 = vst.msk [vmem:[#allocation2 + $0x8] sm:$0xff] %vm352, 0.0
      $region60: #{_loss_impl.1} parent=55 // pred_fallthru
        _
      %v355 = vld [vmem:[%s343] sm:$0xff]
      %v356 = vld [vmem:[%s343 + $0x8] sm:$0xff]
      %v357 = vld [vmem:[%s1] sm:$0xff]
      %v358 = vld [vmem:[%s1 + $0x8] sm:$0xff]
      %v359 = vld [vmem:[%s1 + $0x10] sm:$0xff]
      %v360 = vld [vmem:[%s1 + $0x18] sm:$0xff]
      %v361 = vld [vmem:[%s1 + $0x20] sm:$0xff]
      %v362 = vld [vmem:[%s1 + $0x28] sm:$0xff]
      %v363 = vld [vmem:[%s1 + $0x30] sm:$0xff]
      %v364 = vld [vmem:[%s1 + $0x38] sm:$0xff]
      %v365 = vld [vmem:[%s1 + $0x40] sm:$0xff]
      %v366 = vld [vmem:[%s1 + $0x48] sm:$0xff]
      %v367 = vld [vmem:[%s1 + $0x50] sm:$0xff]
      %v368 = vld [vmem:[%s1 + $0x58] sm:$0xff]
      %v369 = vld [vmem:[%s1 + $0x60] sm:$0xff]
      %v370 = vld [vmem:[%s1 + $0x68] sm:$0xff]
      %v371 = vld [vmem:[%s1 + $0x70] sm:$0xff]
      %v372 = vld [vmem:[%s1 + $0x78] sm:$0xff]
      %v373 = vld [vmem:[%s2] sm:$0x1]
      %v375 = vlaneseq
      %v376 = vshrl.u32 %v375, 7
      %v377 = vsub.s32 0, %v376
      %v378 = vrot.slane %v373, %v377
      %380 = vmatprep.subr.mxu0 0.0
      %381 = vmatpush1.msra.mxu0 %v372
      %382 = vmatprep.subr.mxu0 0.0
      %383 = vmatpush1.msra.mxu0 %v371
      %384 = vmatprep.subr.mxu0 0.0
      %385 = vmatpush1.msra.mxu0 %v370
      %386 = vmatprep.subr.mxu0 0.0
      %387 = vmatpush1.msra.mxu0 %v369
      %388 = vmatprep.subr.mxu0 0.0
      %389 = vmatpush1.msra.mxu0 %v368
      %390 = vmatprep.subr.mxu0 0.0
      %391 = vmatpush1.msra.mxu0 %v367
      %392 = vmatprep.subr.mxu0 0.0
      %393 = vmatpush1.msra.mxu0 %v366
      %394 = vmatprep.subr.mxu0 0.0
      %395 = vmatpush1.msra.mxu0 %v365
      %396 = vmatprep.subr.mxu0 0.0
      %397 = vmatpush1.msra.mxu0 %v364
      %398 = vmatprep.subr.mxu0 0.0
      %399 = vmatpush1.msra.mxu0 %v363
      %400 = vmatprep.subr.mxu0 0.0
      %401 = vmatpush1.msra.mxu0 %v362
      %402 = vmatprep.subr.mxu0 0.0
      %403 = vmatpush1.msra.mxu0 %v361
      %404 = vmatprep.subr.mxu0 0.0
      %405 = vmatpush1.msra.mxu0 %v360
      %406 = vmatprep.subr.mxu0 0.0
      %407 = vmatpush1.msra.mxu0 %v359
      %408 = vmatprep.subr.mxu0 0.0
      %409 = vmatpush1.msra.mxu0 %v358
      %410 = vmatprep.subr.mxu0 0.0
      %411 = vmatpush1.msra.mxu0 %v357
      %412 = vmatprep.subr.mxu0 0.0
      %413 = vmatpush2.msra.mxu0 0.0
      %414 = vmatprep.subr.mxu0 0.0
      %415 = vmatpush2.msra.mxu0 0.0
      %416 = vmatprep.subr.mxu0 0.0
      %417 = vmatpush2.msra.mxu0 0.0
      %418 = vmatprep.subr.mxu0 0.0
      %419 = vmatpush2.msra.mxu0 0.0
      %420 = vmatprep.subr.mxu0 0.0
      %421 = vmatpush2.msra.mxu0 0.0
      %422 = vmatprep.subr.mxu0 0.0
      %423 = vmatpush2.msra.mxu0 0.0
      %424 = vmatprep.subr.mxu0 0.0
      %425 = vmatpush2.msra.mxu0 0.0
      %426 = vmatprep.subr.mxu0 0.0
      %427 = vmatpush2.msra.mxu0 0.0
      %428 = vmatprep.subr.mxu0 0.0
      %429 = vmatpush2.msra.mxu0 0.0
      %430 = vmatprep.subr.mxu0 0.0
      %431 = vmatpush2.msra.mxu0 0.0
      %432 = vmatprep.subr.mxu0 0.0
      %433 = vmatpush2.msra.mxu0 0.0
      %434 = vmatprep.subr.mxu0 0.0
      %435 = vmatpush2.msra.mxu0 0.0
      %436 = vmatprep.subr.mxu0 0.0
      %437 = vmatpush2.msra.mxu0 0.0
      %438 = vmatprep.subr.mxu0 0.0
      %439 = vmatpush2.msra.mxu0 0.0
      %440 = vmatprep.subr.mxu0 0.0
      %441 = vmatpush2.msra.mxu0 0.0
      %442 = vmatprep.subr.mxu0 0.0
      %443 = vmatpush2.msra.mxu0 0.0
      %444 = vmatprep.mubr.f32.mxu0 0.0
      %445 = vmatmul.mubr.f32.gmra.mxu0 %v355
      %v446 = vpop.f32.mrf.mxu0
      %v447 = vadd.f32 %v378, %v446
      %v448 = vpop.f32.mrf.mxu0
      %449 = vmatprep.mubr.f32.mxu0 0.0
      %450 = vmatmul.mubr.f32.gmra.mxu0 %v356
      %v451 = vpop.f32.mrf.mxu0
      %v452 = vadd.f32 %v378, %v451
      %v453 = vpop.f32.mrf.mxu0
      %454 = vdwg.mxu0
      %v455 = vmax.f32 %v447, 0.0
      %v456 = vmax.f32 %v452, 0.0
      %v457 = vld [vmem:[%s3] sm:$0xff]
      %v458 = vld [vmem:[%s3 + $0x8] sm:$0xff]
      %v459 = vld [vmem:[%s3 + $0x10] sm:$0xff]
      %v460 = vld [vmem:[%s3 + $0x18] sm:$0xff]
      %v461 = vld [vmem:[%s3 + $0x20] sm:$0xff]
      %v462 = vld [vmem:[%s3 + $0x28] sm:$0xff]
      %v463 = vld [vmem:[%s3 + $0x30] sm:$0xff]
      %v464 = vld [vmem:[%s3 + $0x38] sm:$0xff]
      %v465 = vld [vmem:[%s3 + $0x40] sm:$0xff]
      %v466 = vld [vmem:[%s3 + $0x48] sm:$0xff]
      %v467 = vld [vmem:[%s3 + $0x50] sm:$0xff]
      %v468 = vld [vmem:[%s3 + $0x58] sm:$0xff]
      %v469 = vld [vmem:[%s3 + $0x60] sm:$0xff]
      %v470 = vld [vmem:[%s3 + $0x68] sm:$0xff]
      %v471 = vld [vmem:[%s3 + $0x70] sm:$0xff]
      %v472 = vld [vmem:[%s3 + $0x78] sm:$0xff]
      %v473 = vld [vmem:[%s4] sm:$0x1]
      %v475 = vlaneseq
      %v476 = vshrl.u32 %v475, 7
      %v477 = vsub.s32 0, %v476
      %v478 = vrot.slane %v473, %v477
      %480 = vmatprep.subr.mxu0 0.0
      %481 = vmatpush1.msra.mxu0 %v472
      %482 = vmatprep.subr.mxu0 0.0
      %483 = vmatpush1.msra.mxu0 %v471
      %484 = vmatprep.subr.mxu0 0.0
      %485 = vmatpush1.msra.mxu0 %v470
      %486 = vmatprep.subr.mxu0 0.0
      %487 = vmatpush1.msra.mxu0 %v469
      %488 = vmatprep.subr.mxu0 0.0
      %489 = vmatpush1.msra.mxu0 %v468
      %490 = vmatprep.subr.mxu0 0.0
      %491 = vmatpush1.msra.mxu0 %v467
      %492 = vmatprep.subr.mxu0 0.0
      %493 = vmatpush1.msra.mxu0 %v466
      %494 = vmatprep.subr.mxu0 0.0
      %495 = vmatpush1.msra.mxu0 %v465
      %496 = vmatprep.subr.mxu0 0.0
      %497 = vmatpush1.msra.mxu0 %v464
      %498 = vmatprep.subr.mxu0 0.0
      %499 = vmatpush1.msra.mxu0 %v463
      %500 = vmatprep.subr.mxu0 0.0
      %501 = vmatpush1.msra.mxu0 %v462
      %502 = vmatprep.subr.mxu0 0.0
      %503 = vmatpush1.msra.mxu0 %v461
      %504 = vmatprep.subr.mxu0 0.0
      %505 = vmatpush1.msra.mxu0 %v460
      %506 = vmatprep.subr.mxu0 0.0
      %507 = vmatpush1.msra.mxu0 %v459
      %508 = vmatprep.subr.mxu0 0.0
      %509 = vmatpush1.msra.mxu0 %v458
      %510 = vmatprep.subr.mxu0 0.0
      %511 = vmatpush1.msra.mxu0 %v457
      %512 = vmatprep.subr.mxu0 0.0
      %513 = vmatpush2.msra.mxu0 0.0
      %514 = vmatprep.subr.mxu0 0.0
      %515 = vmatpush2.msra.mxu0 0.0
      %516 = vmatprep.subr.mxu0 0.0
      %517 = vmatpush2.msra.mxu0 0.0
      %518 = vmatprep.subr.mxu0 0.0
      %519 = vmatpush2.msra.mxu0 0.0
      %520 = vmatprep.subr.mxu0 0.0
      %521 = vmatpush2.msra.mxu0 0.0
      %522 = vmatprep.subr.mxu0 0.0
      %523 = vmatpush2.msra.mxu0 0.0
      %524 = vmatprep.subr.mxu0 0.0
      %525 = vmatpush2.msra.mxu0 0.0
      %526 = vmatprep.subr.mxu0 0.0
      %527 = vmatpush2.msra.mxu0 0.0
      %528 = vmatprep.subr.mxu0 0.0
      %529 = vmatpush2.msra.mxu0 0.0
      %530 = vmatprep.subr.mxu0 0.0
      %531 = vmatpush2.msra.mxu0 0.0
      %532 = vmatprep.subr.mxu0 0.0
      %533 = vmatpush2.msra.mxu0 0.0
      %534 = vmatprep.subr.mxu0 0.0
      %535 = vmatpush2.msra.mxu0 0.0
      %536 = vmatprep.subr.mxu0 0.0
      %537 = vmatpush2.msra.mxu0 0.0
      %538 = vmatprep.subr.mxu0 0.0
      %539 = vmatpush2.msra.mxu0 0.0
      %540 = vmatprep.subr.mxu0 0.0
      %541 = vmatpush2.msra.mxu0 0.0
      %542 = vmatprep.subr.mxu0 0.0
      %543 = vmatpush2.msra.mxu0 0.0
      %544 = vmatprep.mubr.f32.mxu0 0.0
      %545 = vmatmul.mubr.f32.gmra.mxu0 %v455
      %v546 = vpop.f32.mrf.mxu0
      %v547 = vadd.f32 %v478, %v546
      %v548 = vpop.f32.mrf.mxu0
      %549 = vmatprep.mubr.f32.mxu0 0.0
      %550 = vmatmul.mubr.f32.gmra.mxu0 %v456
      %v551 = vpop.f32.mrf.mxu0
      %v552 = vadd.f32 %v478, %v551
      %v553 = vpop.f32.mrf.mxu0
      %554 = vdwg.mxu0
      %v555 = vld [vmem:[%s5] sm:$0xff]
      %v556 = vld [vmem:[%s5 + $0x8] sm:$0xff]
      %v557 = vld [vmem:[%s5 + $0x10] sm:$0xff]
      %v558 = vld [vmem:[%s5 + $0x18] sm:$0xff]
      %v559 = vld [vmem:[%s5 + $0x20] sm:$0xff]
      %v560 = vld [vmem:[%s5 + $0x28] sm:$0xff]
      %v561 = vld [vmem:[%s5 + $0x30] sm:$0xff]
      %v562 = vld [vmem:[%s5 + $0x38] sm:$0xff]
      %v563 = vld [vmem:[%s5 + $0x40] sm:$0xff]
      %v564 = vld [vmem:[%s5 + $0x48] sm:$0xff]
      %v565 = vld [vmem:[%s5 + $0x50] sm:$0xff]
      %v566 = vld [vmem:[%s5 + $0x58] sm:$0xff]
      %v567 = vld [vmem:[%s5 + $0x60] sm:$0xff]
      %v568 = vld [vmem:[%s5 + $0x68] sm:$0xff]
      %v569 = vld [vmem:[%s5 + $0x70] sm:$0xff]
      %v570 = vld [vmem:[%s5 + $0x78] sm:$0xff]
      %v571 = vld [vmem:[%s6] sm:$0x1]
      %v573 = vlaneseq
      %v574 = vshrl.u32 %v573, 7
      %v575 = vsub.s32 0, %v574
      %v576 = vrot.slane %v571, %v575
      %578 = vmatprep.subr.mxu0 0.0
      %579 = vmatpush1.msra.mxu0 %v570
      %580 = vmatprep.subr.mxu0 0.0
      %581 = vmatpush1.msra.mxu0 %v569
      %582 = vmatprep.subr.mxu0 0.0
      %583 = vmatpush1.msra.mxu0 %v568
      %584 = vmatprep.subr.mxu0 0.0
      %585 = vmatpush1.msra.mxu0 %v567
      %586 = vmatprep.subr.mxu0 0.0
      %587 = vmatpush1.msra.mxu0 %v566
      %588 = vmatprep.subr.mxu0 0.0
      %589 = vmatpush1.msra.mxu0 %v565
      %590 = vmatprep.subr.mxu0 0.0
      %591 = vmatpush1.msra.mxu0 %v564
      %592 = vmatprep.subr.mxu0 0.0
      %593 = vmatpush1.msra.mxu0 %v563
      %594 = vmatprep.subr.mxu0 0.0
      %595 = vmatpush1.msra.mxu0 %v562
      %596 = vmatprep.subr.mxu0 0.0
      %597 = vmatpush1.msra.mxu0 %v561
      %598 = vmatprep.subr.mxu0 0.0
      %599 = vmatpush1.msra.mxu0 %v560
      %600 = vmatprep.subr.mxu0 0.0
      %601 = vmatpush1.msra.mxu0 %v559
      %602 = vmatprep.subr.mxu0 0.0
      %603 = vmatpush1.msra.mxu0 %v558
      %604 = vmatprep.subr.mxu0 0.0
      %605 = vmatpush1.msra.mxu0 %v557
      %606 = vmatprep.subr.mxu0 0.0
      %607 = vmatpush1.msra.mxu0 %v556
      %608 = vmatprep.subr.mxu0 0.0
      %609 = vmatpush1.msra.mxu0 %v555
      %610 = vmatprep.subr.mxu0 0.0
      %611 = vmatpush2.msra.mxu0 0.0
      %612 = vmatprep.subr.mxu0 0.0
      %613 = vmatpush2.msra.mxu0 0.0
      %614 = vmatprep.subr.mxu0 0.0
      %615 = vmatpush2.msra.mxu0 0.0
      %616 = vmatprep.subr.mxu0 0.0
      %617 = vmatpush2.msra.mxu0 0.0
      %618 = vmatprep.subr.mxu0 0.0
      %619 = vmatpush2.msra.mxu0 0.0
      %620 = vmatprep.subr.mxu0 0.0
      %621 = vmatpush2.msra.mxu0 0.0
      %622 = vmatprep.subr.mxu0 0.0
      %623 = vmatpush2.msra.mxu0 0.0
      %624 = vmatprep.subr.mxu0 0.0
      %625 = vmatpush2.msra.mxu0 0.0
      %626 = vmatprep.subr.mxu0 0.0
      %627 = vmatpush2.msra.mxu0 0.0
      %628 = vmatprep.subr.mxu0 0.0
      %629 = vmatpush2.msra.mxu0 0.0
      %630 = vmatprep.subr.mxu0 0.0
      %631 = vmatpush2.msra.mxu0 0.0
      %632 = vmatprep.subr.mxu0 0.0
      %633 = vmatpush2.msra.mxu0 0.0
      %634 = vmatprep.subr.mxu0 0.0
      %635 = vmatpush2.msra.mxu0 0.0
      %636 = vmatprep.subr.mxu0 0.0
      %637 = vmatpush2.msra.mxu0 0.0
      %638 = vmatprep.subr.mxu0 0.0
      %639 = vmatpush2.msra.mxu0 0.0
      %640 = vmatprep.subr.mxu0 0.0
      %641 = vmatpush2.msra.mxu0 0.0
      %642 = vmatprep.mubr.f32.mxu0 0.0
      %643 = vmatmul.mubr.f32.gmra.mxu0 %v547
      %v644 = vpop.f32.mrf.mxu0
      %v645 = vadd.f32 %v576, %v644
      %v646 = vpop.f32.mrf.mxu0
      %647 = vmatprep.mubr.f32.mxu0 0.0
      %648 = vmatmul.mubr.f32.gmra.mxu0 %v552
      %v649 = vpop.f32.mrf.mxu0
      %v650 = vadd.f32 %v576, %v649
      %v651 = vpop.f32.mrf.mxu0
      %652 = vdwg.mxu0
      %v653 = vmax.f32 %v645, 0.0
      %v654 = vmax.f32 %v650, 0.0
      %v655 = vld [vmem:[%s7] sm:$0xff]
      %v656 = vld [vmem:[%s7 + $0x8] sm:$0xff]
      %v657 = vld [vmem:[%s7 + $0x10] sm:$0xff]
      %v658 = vld [vmem:[%s7 + $0x18] sm:$0xff]
      %v659 = vld [vmem:[%s7 + $0x20] sm:$0xff]
      %v660 = vld [vmem:[%s7 + $0x28] sm:$0xff]
      %v661 = vld [vmem:[%s7 + $0x30] sm:$0xff]
      %v662 = vld [vmem:[%s7 + $0x38] sm:$0xff]
      %v663 = vld [vmem:[%s7 + $0x40] sm:$0xff]
      %v664 = vld [vmem:[%s7 + $0x48] sm:$0xff]
      %v665 = vld [vmem:[%s7 + $0x50] sm:$0xff]
      %v666 = vld [vmem:[%s7 + $0x58] sm:$0xff]
      %v667 = vld [vmem:[%s7 + $0x60] sm:$0xff]
      %v668 = vld [vmem:[%s7 + $0x68] sm:$0xff]
      %v669 = vld [vmem:[%s7 + $0x70] sm:$0xff]
      %v670 = vld [vmem:[%s7 + $0x78] sm:$0xff]
      %v671 = vld [vmem:[%s8] sm:$0x1]
      %v673 = vlaneseq
      %v674 = vshrl.u32 %v673, 7
      %v675 = vsub.s32 0, %v674
      %v676 = vrot.slane %v671, %v675
      %678 = vmatprep.subr.mxu0 0.0
      %679 = vmatpush1.msra.mxu0 %v670
      %680 = vmatprep.subr.mxu0 0.0
      %681 = vmatpush1.msra.mxu0 %v669
      %682 = vmatprep.subr.mxu0 0.0
      %683 = vmatpush1.msra.mxu0 %v668
      %684 = vmatprep.subr.mxu0 0.0
      %685 = vmatpush1.msra.mxu0 %v667
      %686 = vmatprep.subr.mxu0 0.0
      %687 = vmatpush1.msra.mxu0 %v666
      %688 = vmatprep.subr.mxu0 0.0
      %689 = vmatpush1.msra.mxu0 %v665
      %690 = vmatprep.subr.mxu0 0.0
      %691 = vmatpush1.msra.mxu0 %v664
      %692 = vmatprep.subr.mxu0 0.0
      %693 = vmatpush1.msra.mxu0 %v663
      %694 = vmatprep.subr.mxu0 0.0
      %695 = vmatpush1.msra.mxu0 %v662
      %696 = vmatprep.subr.mxu0 0.0
      %697 = vmatpush1.msra.mxu0 %v661
      %698 = vmatprep.subr.mxu0 0.0
      %699 = vmatpush1.msra.mxu0 %v660
      %700 = vmatprep.subr.mxu0 0.0
      %701 = vmatpush1.msra.mxu0 %v659
      %702 = vmatprep.subr.mxu0 0.0
      %703 = vmatpush1.msra.mxu0 %v658
      %704 = vmatprep.subr.mxu0 0.0
      %705 = vmatpush1.msra.mxu0 %v657
      %706 = vmatprep.subr.mxu0 0.0
      %707 = vmatpush1.msra.mxu0 %v656
      %708 = vmatprep.subr.mxu0 0.0
      %709 = vmatpush1.msra.mxu0 %v655
      %710 = vmatprep.subr.mxu0 0.0
      %711 = vmatpush2.msra.mxu0 0.0
      %712 = vmatprep.subr.mxu0 0.0
      %713 = vmatpush2.msra.mxu0 0.0
      %714 = vmatprep.subr.mxu0 0.0
      %715 = vmatpush2.msra.mxu0 0.0
      %716 = vmatprep.subr.mxu0 0.0
      %717 = vmatpush2.msra.mxu0 0.0
      %718 = vmatprep.subr.mxu0 0.0
      %719 = vmatpush2.msra.mxu0 0.0
      %720 = vmatprep.subr.mxu0 0.0
      %721 = vmatpush2.msra.mxu0 0.0
      %722 = vmatprep.subr.mxu0 0.0
      %723 = vmatpush2.msra.mxu0 0.0
      %724 = vmatprep.subr.mxu0 0.0
      %725 = vmatpush2.msra.mxu0 0.0
      %726 = vmatprep.subr.mxu0 0.0
      %727 = vmatpush2.msra.mxu0 0.0
      %728 = vmatprep.subr.mxu0 0.0
      %729 = vmatpush2.msra.mxu0 0.0
      %730 = vmatprep.subr.mxu0 0.0
      %731 = vmatpush2.msra.mxu0 0.0
      %732 = vmatprep.subr.mxu0 0.0
      %733 = vmatpush2.msra.mxu0 0.0
      %734 = vmatprep.subr.mxu0 0.0
      %735 = vmatpush2.msra.mxu0 0.0
      %736 = vmatprep.subr.mxu0 0.0
      %737 = vmatpush2.msra.mxu0 0.0
      %738 = vmatprep.subr.mxu0 0.0
      %739 = vmatpush2.msra.mxu0 0.0
      %740 = vmatprep.subr.mxu0 0.0
      %741 = vmatpush2.msra.mxu0 0.0
      %742 = vmatprep.mubr.f32.mxu0 0.0
      %743 = vmatmul.mubr.f32.gmra.mxu0 %v653
      %v744 = vpop.f32.mrf.mxu0
      %v745 = vadd.f32 %v676, %v744
      %v746 = vpop.f32.mrf.mxu0
      %747 = vmatprep.mubr.f32.mxu0 0.0
      %748 = vmatmul.mubr.f32.gmra.mxu0 %v654
      %v749 = vpop.f32.mrf.mxu0
      %v750 = vadd.f32 %v676, %v749
      %v751 = vpop.f32.mrf.mxu0
      %752 = vdwg.mxu0
      %v753 = vmul.f32 %v547, %v547
      %v754 = vmul.f32 %v552, %v552
      %755 = vadd.xlane.f32.xlu0 %v753
      %v756 = vpop.xlane.xlu0 %755
      %757 = vadd.xlane.f32.xlu0 %v754
      %v758 = vpop.xlane.xlu0 %757
      %v759 = vmul.f32 %v745, %v745
      %v760 = vmul.f32 %v750, %v750
      %761 = vadd.xlane.f32.xlu0 %v759
      %v762 = vpop.xlane.xlu0 %761
      %763 = vadd.xlane.f32.xlu0 %v760
      %v764 = vpop.xlane.xlu0 %763
      %v765 = vmul.f32 %v745, %v552
      %v766 = vmul.f32 %v750, %v547
      %767 = vadd.xlane.f32.xlu0 %v765
      %v768 = vpop.xlane.xlu0 %767
      %769 = vadd.xlane.f32.xlu0 %v766
      %v770 = vpop.xlane.xlu0 %769
      %v771 = vmax.f32 %v762, 1e-24
      %v772 = vmax.f32 %v764, 1e-24
      %v773 = vrsqrt.pop %v771
      %v774 = vrsqrt.pop %v772
      %v775 = vmul.f32 %v768, %v773
      %v776 = vmul.f32 %v770, %v774
      %v777 = vmax.f32 %v758, 1e-24
      %v778 = vmax.f32 %v756, 1e-24
      %v779 = vrsqrt.pop %v777
      %v780 = vrsqrt.pop %v778
      %v781 = vmul.f32 %v775, %v779
      %v782 = vmul.f32 %v776, %v780
      %s783 = sadd.s32 %s24, %s25
      %v784 = vlaneseq
      %v785 = vshrl.u32 %v784, 7
      %v786 = vadd.s32 %v785, 8
      %vm787 = vcmp.ge.s32.totalorder %v785, 8
      %vm788 = vcmp.ge.s32.totalorder %v786, 8
      %v789 = vsub.s32 %v785, 8
      %v790 = vsel %vm787, %v789, %v785
      %v791 = vsel %vm788, %v785, %v786
      %s792 = smul.u32 %s783, 8
      %v793 = vstv %s792
      %v794 = vadd.s32 %v793, %v790
      %v795 = vadd.s32 %v793, %v791
      %vm796 = vcmp.lt.s32.totalorder %v794, 12
      %vm797 = vcmp.lt.s32.totalorder %v795, 12
      %v798 = vsel %vm796, %v781, 0.0
      %v799 = vsel %vm797, %v782, 0.0
      %v800 = vld [vmem:[#allocation2] sm:$0xff]
      %v801 = vld [vmem:[#allocation2 + $0x8] sm:$0xff]
      %v802 = vadd.f32 %v800, %v798
      %v803 = vadd.f32 %v801, %v799
      %vm804 = vcmask 7168
      %805 = vst.msk [vmem:[#allocation2] sm:$0xff] %vm804, %v802
      %806 = vst.msk [vmem:[#allocation2 + $0x8] sm:$0xff] %vm804, %v803
      // Predicated region
      $region61: #{_loss_impl.1} parent=55 // pred_check
        %p807 = pneg %p348
      $region62: #{_loss_impl.1} parent=55 // pred_check_branch
        %809 = sbr.rel (%p807) target = $region64
      $region63: #{_loss_impl.1} parent=55 // pred_region
        %v810 = vld [vmem:[#allocation2] sm:$0xff]
        %v811 = vld [vmem:[#allocation2 + $0x8] sm:$0xff]
        %v812 = vsel %vm804, %v810, 0.0
        %v813 = vsel %vm804, %v811, 0.0
        %v814 = vadd.f32 %v812, %v813
        %v815 = vrot.slane %v814, 4
        %v816 = vadd.f32 %v814, %v815
        %v817 = vrot.slane %v816, 2
        %v818 = vadd.f32 %v816, %v817
        %v819 = vrot.slane %v818, 1
        %v820 = vadd.f32 %v818, %v819
        %v821 = vmul.f32 %v820, -0.041666668
        %vm822 = vcmask 0
        %823 = vst.msk [vmem:[%s347] sm:$0x1] %vm822, %v821
      $region64: #{_loss_impl.1} parent=55 // pred_fallthru
        _
      %p824 = scmp.lt.s32.totalorder %s24, 1
      %s825 = scalar_select %p824, %s24, 1
      %s826 = scalar_lea.vmem %s9, %s825
      // Predicated region
      $region65: #{_loss_impl.1} parent=55 // pred_check
        %p827 = pneg %p246
      $region66: #{_loss_impl.1} parent=55 // pred_check_branch
        %829 = sbr.rel (%p827) target = $region68
      $region67: #{_loss_impl.1} parent=55 // pred_region
        _
      $region68: #{_loss_impl.1} parent=55 // pred_fallthru
        _
    $region56: #{_loss_impl.1} parent=5 // pred_fallthru
      _
    %p830 = scmp.le.s32.totalorder 2, %s15
    // Predicated region
    $region69: #{_loss_impl.1} parent=5 // pred_check
      %p831 = pneg %p830
    $region70: #{_loss_impl.1} parent=5 // pred_check_branch
      %833 = sbr.rel (%p831) target = $region72
    $region71: #{_loss_impl.1} parent=5 // pred_region
      %s834 = ssub.s32 %s15, 2
      // Predicated region
      $region73: #{_loss_impl.1} parent=71 // pred_check
        %p835 = pneg %p252
      $region74: #{_loss_impl.1} parent=71 // pred_check_branch
        %837 = sbr.rel (%p835) target = $region76
      $region75: #{_loss_impl.1} parent=71 // pred_region
        %p838 = scmp.lt.s32.totalorder %s26, 1
        %s839 = scalar_select %p838, %s26, 1
        %s840 = scalar_lea.vmem %s9, %s839
      $region76: #{_loss_impl.1} parent=71 // pred_fallthru
        _
    $region72: #{_loss_impl.1} parent=5 // pred_fallthru
      _
  $region6: #{_loss_impl.1} parent=0 // loop_footer
    %s19 = sadd.s32 1, %s15
  $region7: #{_loss_impl.1} parent=0 // loop_footer_branch
    %14 = sbr.rel target = $region3
  $region8: #{_loss_impl.1} parent=0 // loop_exit
    _

</llo_original>
